<compile_context>
chip_gen: v6e
topology: v6e:2x2x1
jax: 0.10.0
libtpu: 0.0.40
codegen_flags: <defaults>
</compile_context>

<pallas_src>
import jax
import jax.numpy as jnp
from jax.experimental import pallas as pl
from jax.experimental.pallas import tpu as pltpu


# 4 MiB blocks -> 3 refs x 2 pipeline buffers x 4 MiB = 24 MiB VMEM, under the
# explicit 32 MiB limit we request (physically safe on v5e/v6e/v7x).
_DEFAULT_MAX_BLOCK_BYTES = 4 << 20
_VMEM_LIMIT_BYTES = 32 * 1024 * 1024


def _add_pos_kernel(x_ref, pos_ref, o_ref):
    # x_ref / o_ref: (TB, TR, C); pos_ref: (TR, C), broadcast over the leading
    # (batch) axis.  pos is cast in-kernel (VPU slots are idle in this
    # DMA-bound kernel), so the wrapper never materializes a casted pos copy.
    o_ref[...] = (x_ref[...] + pos_ref[...].astype(x_ref.dtype)).astype(o_ref.dtype)


def _compiler_params(semantics):
    return pltpu.CompilerParams(
        dimension_semantics=semantics,
        vmem_limit_bytes=_VMEM_LIMIT_BYTES,
    )


def _add_batched_block(x3, pos2, tb):
    """One row tile per sample; batch folded into the block. grid=(ceil(B/TB),)."""
    B, R, C = x3.shape
    return pl.pallas_call(
        _add_pos_kernel,
        out_shape=jax.ShapeDtypeStruct((B, R, C), x3.dtype),
        grid_spec=pltpu.PrefetchScalarGridSpec(
            num_scalar_prefetch=0,
            grid=(pl.cdiv(B, tb),),
            in_specs=[
                pl.BlockSpec((tb, R, C), lambda b: (b, 0, 0)),
                pl.BlockSpec((R, C), lambda b: (0, 0)),  # pos: constant block
            ],
            out_specs=pl.BlockSpec((tb, R, C), lambda b: (b, 0, 0)),
        ),
        compiler_params=_compiler_params(("parallel",)),
    )(x3, pos2)


def _add_seq_tiled(x3, pos2, tile_rows):
    """Row axis tiled; batch innermost so the pos tile is DMA'd once per tile."""
    B, R, C = x3.shape
    num_tiles = pl.cdiv(R, tile_rows)
    return pl.pallas_call(
        _add_pos_kernel,
        out_shape=jax.ShapeDtypeStruct((B, R, C), x3.dtype),
        grid_spec=pltpu.PrefetchScalarGridSpec(
            num_scalar_prefetch=0,
            grid=(num_tiles, B),  # batch innermost: pos block reused across B
            in_specs=[
                pl.BlockSpec((1, tile_rows, C), lambda j, b: (b, j, 0)),
                pl.BlockSpec((tile_rows, C), lambda j, b: (j, 0)),
            ],
            out_specs=pl.BlockSpec((1, tile_rows, C), lambda j, b: (b, j, 0)),
        ),
        compiler_params=_compiler_params(("parallel", "parallel")),
    )(x3, pos2)


def learnable_positional_encoding(x, pos_embed, *, max_block_bytes=None):
    """x: [B, S, D]; pos_embed: [1, S_max, D] with S_max >= S. Returns x + pos[:, :S]."""
    B, S, D = x.shape
    _, S_max, D_p = pos_embed.shape
    if D_p != D:
        raise ValueError(f"d_model mismatch: x has {D}, pos_embed has {D_p}")
    if S > S_max:
        raise ValueError(f"sequence length {S} exceeds pos_embed capacity {S_max}")

    if max_block_bytes is None:
        max_block_bytes = _DEFAULT_MAX_BLOCK_BYTES
    itemsize = jnp.dtype(x.dtype).itemsize
    # dtype-native sublane multiple: 8 (f32), 16 (bf16/f16), 32 (int8/fp8)
    sublane = 8 * max(1, 4 // itemsize)

    if D % 128 == 0:
        # Natural layout is already lane dense: pos is windowed via index_map.
        rows, cols = S, D
        x3 = x
        pos2 = pos_embed.reshape(S_max, D)  # drop leading 1: free, layout unchanged
    elif (S * D) % 128 == 0:
        # Small d_model: flatten each sample so stores are full-lane vst's.
        rows, cols = (S * D) // 128, 128
        x3 = x.reshape(B, rows, cols)
        pos2 = pos_embed.reshape(-1)[: S * D].reshape(rows, cols)
    else:
        # TODO(synk): no 128-friendly factorization; XLA's fused add is as good.
        return x + pos_embed[:, :S, :].astype(x.dtype)

    row_bytes = cols * itemsize
    max_rows = max(sublane, (max_block_bytes // row_bytes) // sublane * sublane)

    if rows <= max_rows:
        # --- Case A: whole per-sample extent fits one block -> fold batch in.
        if rows % 8 != 0 and pos2.shape[0] != rows:
            # pos block rows must be a multiple of 8 OR the full pos extent;
            # make it the latter with a cheap S*D-element slice.
            pos2 = pos2[:rows]
        per_sample_bytes = rows * row_bytes
        tb = min(B, max(1, max_block_bytes // per_sample_bytes))
        # Megacore: if everything landed in a single grid step but the work is
        # substantial, split the batch so v7x's second TensorCore is used.
        if tb == B and B >= 2 and B * per_sample_bytes > max_block_bytes // 2:
            tb = -(-B // 2)
        out3 = _add_batched_block(x3, pos2, tb)
    else:
        # --- Case B: tile the row axis; max_rows is a sublane multiple so both
        # x and pos block shapes are legal; partial last tile is masked by Pallas.
        out3 = _add_seq_tiled(x3, pos2, max_rows)

    return out3.reshape(B, S, D)


if __name__ == "__main__":
    key = jax.random.PRNGKey(0)
    k1, k2, k3, k4, k5, k6, k7, k8 = jax.random.split(key, 8)

    # --- Test 1: module-spec shapes (d_model=32 -> flattened lane-dense path,
    # batch folded into a single grid step).
    B, S, D, S_MAX = 2, 8, 32, 100  # matches `seq_len = 100` in the PyTorch module
    pos1 = jax.random.normal(k1, (1, S_MAX, D), dtype=jnp.float32)
    x1 = jax.random.normal(k2, (B, S, D), dtype=jnp.float32)
    o1 = jax.block_until_ready(learnable_positional_encoding(x1, pos1))
    r1 = x1 + pos1[:, :S, :]
    assert o1.shape == (B, S, D) and o1.dtype == x1.dtype
    assert jnp.allclose(o1, r1, atol=1e-6), "mismatch vs reference (test 1)"

    # --- Test 2: 128-aligned d_model, S not a multiple of 8 (pos-slice guard).
    B2, S2, D2, S_MAX2 = 2, 12, 128, 16
    pos2 = jax.random.normal(k3, (1, S_MAX2, D2), dtype=jnp.float32)
    x2 = jax.random.normal(k4, (B2, S2, D2), dtype=jnp.float32)
    o2 = jax.block_until_ready(learnable_positional_encoding(x2, pos2))
    assert jnp.allclose(o2, x2 + pos2[:, :S2, :], atol=1e-6), "mismatch (test 2)"

    # --- Test 3: bf16 activations + f32 pos params (in-kernel cast path).
    B3, S3, D3, S_MAX3 = 2, 24, 128, 100
    pos3 = jax.random.normal(k5, (1, S_MAX3, D3), dtype=jnp.float32)
    x3 = jax.random.normal(k6, (B3, S3, D3), dtype=jnp.bfloat16)
    o3 = jax.block_until_ready(learnable_positional_encoding(x3, pos3))
    r3 = x3 + pos3[:, :S3, :].astype(jnp.bfloat16)
    assert o3.dtype == jnp.bfloat16
    assert jnp.allclose(o3.astype(jnp.float32), r3.astype(jnp.float32),
                        atol=1e-2), "mismatch vs reference (test 3)"

    # --- Test 4: force the sequence-tiled path with a partial last tile by
    # shrinking the block cap (locks in masked-writeback behavior).
    B4, S4, D4, S_MAX4 = 2, 40, 128, 100
    pos4 = jax.random.normal(k7, (1, S_MAX4, D4), dtype=jnp.float32)
    x4 = jax.random.normal(k8, (B4, S4, D4), dtype=jnp.float32)
    o4 = jax.block_until_ready(
        learnable_positional_encoding(x4, pos4, max_block_bytes=8192))
    assert jnp.allclose(o4, x4 + pos4[:, :S4, :], atol=1e-6), "mismatch (test 4)"

    print("KERNEL_OK")
</pallas_src>

<mosaic_0001>
module attributes {stable_mosaic.version = 11 : i64} {
  func.func @_add_pos_kernel(%arg0: i32, %arg1: memref<2x2x128xf32, #tpu.memory_space<vmem>>, %arg2: memref<2x128xf32, #tpu.memory_space<vmem>>, %arg3: memref<2x2x128xf32, #tpu.memory_space<vmem>>) attributes {dimension_semantics = [#tpu.dimension_semantics<parallel>], iteration_bounds = array<i64: 1>, scalar_prefetch = 0 : i64, scratch_operands = 0 : i64, tpu.core_type = #tpu.core_type<tc>, window_params = [{transform_indices = @transform_0, window_bounds = array<i64: 2, 2, 128>}, {pipeline_mode = #tpu.pipeline_mode<synchronous>, transform_indices = @transform_1, window_bounds = array<i64: 2, 128>}, {transform_indices = @transform_2, window_bounds = array<i64: 2, 2, 128>}]} {
    %c0 = arith.constant 0 : index
    %c0_0 = arith.constant 0 : index
    %c0_1 = arith.constant 0 : index
    %0 = vector.load %arg1[%c0, %c0_0, %c0_1] : memref<2x2x128xf32, #tpu.memory_space<vmem>>, vector<2x2x128xf32>
    %c0_2 = arith.constant 0 : index
    %c0_3 = arith.constant 0 : index
    %1 = vector.load %arg2[%c0_2, %c0_3] : memref<2x128xf32, #tpu.memory_space<vmem>>, vector<2x128xf32>
    %2 = vector.shape_cast %1 : vector<2x128xf32> to vector<1x2x128xf32>
    %3 = vector.broadcast %2 : vector<1x2x128xf32> to vector<2x2x128xf32>
    %4 = arith.addf %0, %3 : vector<2x2x128xf32>
    %c0_4 = arith.constant 0 : index
    %c0_5 = arith.constant 0 : index
    %c0_6 = arith.constant 0 : index
    %5 = vector.load %arg3[%c0_4, %c0_5, %c0_6] : memref<2x2x128xf32, #tpu.memory_space<vmem>>, vector<2x2x128xf32>
    tpu.vector_store %arg3[%c0_4, %c0_5, %c0_6], %4 {strides = array<i32>} : memref<2x2x128xf32, #tpu.memory_space<vmem>>, vector<2x2x128xf32>,
    return
  }
  func.func @transform_0(%arg0: i32) -> (i32, i32, i32) {
    %c0_i32 = arith.constant 0 : i32
    %c0_i32_0 = arith.constant 0 : i32
    %c0_i32_1 = arith.constant 0 : i32
    return %arg0, %c0_i32, %c0_i32_0 : i32, i32, i32
  }
  func.func @transform_1(%arg0: i32) -> (i32, i32) {
    %c0_i32 = arith.constant 0 : i32
    %c0_i32_0 = arith.constant 0 : i32
    %c0_i32_1 = arith.constant 0 : i32
    return %c0_i32, %c0_i32_0 : i32, i32
  }
  func.func @transform_2(%arg0: i32) -> (i32, i32, i32) {
    %c0_i32 = arith.constant 0 : i32
    %c0_i32_0 = arith.constant 0 : i32
    %c0_i32_1 = arith.constant 0 : i32
    return %arg0, %c0_i32, %c0_i32_0 : i32, i32, i32
  }
}

</mosaic_0001>

<llo_original>
// kernel: tpu_custom_call.1
$region0: #{tpu_custom_call.1}
  #allocation0 [shape = 'u32[]', space=smem, size = 0x4, offset = 0x4, fixed_abs, tag = 'smem constant byte address 0x4 - core index']
  #allocation1 [shape = 'u32[144,128]{1,0:T(1,128)}', space=vmem, size = 0x12000, scoped, tag = 'internal scratch']
  %s0 = inlined_call_operand.hbm [shape: f32[2,2,128], index: 0, kind: input, shape index: {}]
  %s1 = inlined_call_operand.hbm [shape: f32[2,128], index: 1, kind: input, shape index: {}]
  %s2 = inlined_call_operand.hbm [shape: f32[2,2,128], index: 2, kind: output, shape index: {}]
  %s3 = sld [smem:[#allocation0]]
  $region26: #{tpu_custom_call.1} parent=0
    _
  %s5 = ssub.s32 1, %s3
  %s6 = scalar_select 0, %s5, %s3
  $region1: #{tpu_custom_call.1} parent=0
    #allocation2 [shape = 'u8[2048]{0}', space=vmem, size = 0x800, scoped, tag = 'input window, operand 0, single buffered']
    #allocation3 [shape = 's32[1]{0}', space=sflag, size = 0x4, scoped, tag = 'scoped memory for tpu_custom_call.1']
    #allocation4 [shape = 's32[1]{0}', space=sflag, size = 0x4, scoped, tag = 'scoped memory for tpu_custom_call.1']
    #allocation5 [shape = 'u8[1024]{0}', space=vmem, size = 0x400, scoped, tag = 'input window, operand 1, single buffered']
    #allocation6 [shape = 's32[1]{0}', space=sflag, size = 0x4, scoped, tag = 'scoped memory for tpu_custom_call.1']
    #allocation7 [shape = 'u8[2048]{0}', space=vmem, size = 0x800, scoped, tag = 'output window, operand 0, single buffered']
    %7 = vsyncpa [#allocation3], 0
    %8 = vsyncpa [#allocation6], 0
    %9 = vsyncpa [#allocation4], 0
    // Predicated region
    $region2: #{tpu_custom_call.1} parent=1 // pred_check
      _
    $region3: #{tpu_custom_call.1} parent=1 // pred_check_branch
      %11 = sbr.rel (0) target = $region5
    $region4: #{tpu_custom_call.1} parent=1 // pred_region
      %s13 = ssub.s32 64, 64
      %14 = vsyncadd [#allocation3], %s13
      %s15 = sshll.u32 [#allocation2], 4
      %s16 = int_to_ptr.vmem [resolvable:$true] %s15
      %21 = dma.hbm_to_vmem [thread:$0]  %s0, 64, %s16, [#allocation3], 32, 32, 2
    $region5: #{tpu_custom_call.1} parent=1 // pred_fallthru
      _
    // Predicated region
    $region6: #{tpu_custom_call.1} parent=1 // pred_check
      _
    $region7: #{tpu_custom_call.1} parent=1 // pred_check_branch
      %23 = sbr.rel (0) target = $region9
    $region8: #{tpu_custom_call.1} parent=1 // pred_region
      %s25 = ssub.s32 32, 32
      %26 = vsyncadd [#allocation6], %s25
      %s28 = sshll.u32 [#allocation5], 4
      %s29 = int_to_ptr.vmem [resolvable:$true] %s28
      %31 = dma.hbm_to_vmem [thread:$0]  %s1, 32, %s29, [#allocation6]
    $region9: #{tpu_custom_call.1} parent=1 // pred_fallthru
      _
    // Predicated region
    $region10: #{tpu_custom_call.1} parent=1 // pred_check
      _
    $region11: #{tpu_custom_call.1} parent=1 // pred_check_branch
      %33 = sbr.rel (0) target = $region13
    $region12: #{tpu_custom_call.1} parent=1 // pred_region
      %34 = dma.done [#allocation3], 64
    $region13: #{tpu_custom_call.1} parent=1 // pred_fallthru
      _
    // Predicated region
    $region14: #{tpu_custom_call.1} parent=1 // pred_check
      _
    $region15: #{tpu_custom_call.1} parent=1 // pred_check_branch
      %36 = sbr.rel (0) target = $region17
    $region16: #{tpu_custom_call.1} parent=1 // pred_region
      %37 = dma.done [#allocation6], 32
    $region17: #{tpu_custom_call.1} parent=1 // pred_fallthru
      _
    %v38 = vld [vmem:[#allocation2] sm:$0x3]
    %v39 = vld [vmem:[#allocation2 + $0x2] sm:$0x3]
    %v40 = vld [vmem:[#allocation5] sm:$0x3]
    %v41 = vadd.f32 %v38, %v40
    %v42 = vadd.f32 %v39, %v40
    %43 = vst [vmem:[#allocation7] sm:$0x3] %v41
    %44 = vst [vmem:[#allocation7 + $0x2] sm:$0x3] %v42
    // Predicated region
    $region18: #{tpu_custom_call.1} parent=1 // pred_check
      _
    $region19: #{tpu_custom_call.1} parent=1 // pred_check_branch
      %46 = sbr.rel (0) target = $region21
    $region20: #{tpu_custom_call.1} parent=1 // pred_region
      %s48 = ssub.s32 64, 64
      %49 = vsyncadd [#allocation4], %s48
      %s50 = sshll.u32 [#allocation7], 4
      %s51 = int_to_ptr.vmem [resolvable:$true] %s50
      %56 = dma.vmem_to_hbm [thread:$0]  %s51, 64, %s2, [#allocation4], 32, 32, 2
    $region21: #{tpu_custom_call.1} parent=1 // pred_fallthru
      _
    // Predicated region
    $region22: #{tpu_custom_call.1} parent=1 // pred_check
      _
    $region23: #{tpu_custom_call.1} parent=1 // pred_check_branch
      %58 = sbr.rel (0) target = $region25
    $region24: #{tpu_custom_call.1} parent=1 // pred_region
      %59 = dma.done [#allocation4], 64
    $region25: #{tpu_custom_call.1} parent=1 // pred_fallthru
      _
    %60 = vsyncpa [#allocation3], 1
    %61 = vsyncpa [#allocation6], 1
    %62 = vsyncpa [#allocation4], 1

</llo_original>
